<compile_context>
chip_gen: v7x
topology: tpu7x:2x2x1
jax: 0.10.0
libtpu: 0.0.40
codegen_flags: <defaults>
</compile_context>

<pallas_src>
import functools

import jax
import jax.numpy as jnp
from jax import lax
from jax.experimental import pallas as pl
from jax.experimental.pallas import tpu as pltpu


def _round_up(x, m):
    return ((x + m - 1) // m) * m


def _largest_divisor_leq(n, cap):
    d = max(1, min(n, cap))
    while n % d:
        d -= 1
    return d


# ---------------------------------------------------------------------------
# Stage 1: fused input projections  [l | h | g] = p @ [Wl | Wh | Wg] + bias
# (hoisted out of the flash loop -- each row of p is projected exactly once).
# ---------------------------------------------------------------------------
def _projection_kernel(p_ref, w_ref, b_ref, l_ref, h_ref, g_ref, *, d_pad):
    bb, tm, cin = p_ref.shape
    # Flatten (batch, rows) so ONE wide MXU matmul is issued instead of `bb`
    # small batched ones (fills the 256x256 MXU on v6e/v7x, 128x128 on v5e).
    x = p_ref[...].reshape(bb * tm, cin).astype(jnp.bfloat16)
    y = jnp.dot(x, w_ref[...], preferred_element_type=jnp.float32) + b_ref[...]
    y = y.astype(jnp.bfloat16)
    # Column splits are 128-lane aligned -> layout-free slices.
    l_ref[...] = y[:, :d_pad].reshape(bb, tm, d_pad)
    h_ref[...] = y[:, d_pad:2 * d_pad].reshape(bb, tm, d_pad)
    g_ref[...] = y[:, 2 * d_pad:].reshape(bb, tm, g_ref.shape[-1])


# ---------------------------------------------------------------------------
# Stage 2: flash-style attention with residual  out = p + softmax(l h^T) g
# grid = (batch blocks, query blocks, kv blocks); kv axis is "arbitrary" and
# drives an online-softmax accumulator held in VMEM scratch.
# ---------------------------------------------------------------------------
def _flash_attention_kernel(p_ref, l_ref, h_ref, g_ref, o_ref,
                            m_scr, s_scr, acc_scr):
    kv = pl.program_id(2)

    @pl.when(kv == 0)
    def _init():
        m_scr[...] = jnp.full(m_scr.shape, -jnp.inf, dtype=m_scr.dtype)
        s_scr[...] = jnp.zeros(s_scr.shape, dtype=s_scr.dtype)
        acc_scr[...] = jnp.zeros(acc_scr.shape, dtype=acc_scr.dtype)

    # scores = l @ h^T, contracting over D -- no materialized transpose.
    scores = lax.dot_general(l_ref[...], h_ref[...],
                             dimension_numbers=(((2,), (2,)), ((0,), (0,))),
                             preferred_element_type=jnp.float32)    # (Bb, TQ, TK)

    # Online-softmax update (f32 on the VPU/EUP).
    m_prev = m_scr[...]
    m_new = jnp.maximum(m_prev, jnp.max(scores, axis=-1, keepdims=True))
    alpha = jnp.exp(m_prev - m_new)
    e = jnp.exp(scores - m_new)
    s_scr[...] = alpha * s_scr[...] + jnp.sum(e, axis=-1, keepdims=True)
    acc_scr[...] = alpha * acc_scr[...] + lax.dot_general(
        e.astype(jnp.bfloat16), g_ref[...],
        dimension_numbers=(((2,), (1,)), ((0,), (0,))),
        preferred_element_type=jnp.float32)                         # (Bb, TQ, Cu)
    m_scr[...] = m_new

    @pl.when(kv == pl.num_programs(2) - 1)
    def _finalize():
        # approx reciprocal runs on the EUP slot (~free); error ~1e-3 relative,
        # below the bf16-matmul noise already present.
        inv = pl.reciprocal(s_scr[...], approx=True)
        o_ref[...] = (p_ref[...] + acc_scr[...] * inv).astype(o_ref.dtype)


def self_attention(p, wh, bh, wl, bl, wg, bg, *,
                   block_b=None, block_q=None, block_kv=None,
                   vmem_limit_bytes=None):
    """SelfAttention forward.

    p: (B, M, C); wh/wl: (C, D); bh/bl: (1, D) or (D,); wg: (C, C); bg: (1, C) or (C,).
    """
    B, M, C = p.shape
    D = wh.shape[1]

    Cu = _round_up(C, 128)     # lane-dense channel width
    Du = _round_up(D, 128)     # lane-dense hidden width
    pad_c, pad_d = (Cu != C), (Du != D)

    f32, bf16 = jnp.float32, jnp.bfloat16
    p_bytes = jnp.dtype(p.dtype).itemsize

    # -------- tile selection --------------------------------------------------
    if block_q is None:
        block_q = _largest_divisor_leq(M, 256)
    if block_kv is None:
        block_kv = _largest_divisor_leq(M, 256)
    if block_b is None:
        block_b = _largest_divisor_leq(B, 8) if M <= 128 else 1
        # Keep >= 2 steps on the parallel grid axes (v7x megacore occupancy).
        while block_b > 1 and (B // block_b) * (M // block_q) < 2:
            block_b = _largest_divisor_leq(B, block_b - 1)
    assert B % block_b == 0 and M % block_q == 0 and M % block_kv == 0

    # -------- pad channels/hidden to 128-lane multiples (exact no-ops) --------
    # Padding is skipped entirely when C / D are already aligned.
    p_in = jnp.pad(p, ((0, 0), (0, 0), (0, Cu - C))) if pad_c else p
    wl_p = jnp.pad(wl.astype(f32), ((0, Cu - C), (0, Du - D))) if (pad_c or pad_d) else wl.astype(f32)
    wh_p = jnp.pad(wh.astype(f32), ((0, Cu - C), (0, Du - D))) if (pad_c or pad_d) else wh.astype(f32)
    wg_p = jnp.pad(wg.astype(f32), ((0, Cu - C), (0, Cu - C))) if pad_c else wg.astype(f32)
    bl_p = jnp.pad(bl.reshape(1, -1).astype(f32), ((0, 0), (0, Du - D)))
    bh_p = jnp.pad(bh.reshape(1, -1).astype(f32), ((0, 0), (0, Du - D)))
    bg_p = jnp.pad(bg.reshape(1, -1).astype(f32), ((0, 0), (0, Cu - C)))

    # One wide projection weight  [Wl | Wh | Wg]  (bf16 for the MXU).
    w_lhg = jnp.concatenate([wl_p, wh_p, wg_p], axis=1).astype(bf16)   # (Cu, Wtot)
    b_lhg = jnp.concatenate([bl_p, bh_p, bg_p], axis=1)                # (1, Wtot) f32
    w_tot = 2 * Du + Cu

    # ===================== stage 1: projections (one pass) ====================
    pm = _largest_divisor_leq(M, 256)
    pb = _largest_divisor_leq(B, max(1, 512 // pm))
    while pb > 1 and (B // pb) * (M // pm) < 2:
        pb = _largest_divisor_leq(B, pb - 1)

    proj_budget = (2 * (pb * pm * Cu * p_bytes           # p blocks (double-buffered)
                        + 2 * pb * pm * Du * 2           # l, h output blocks
                        + pb * pm * Cu * 2)               # g output blocks
                   + 2 * (Cu * w_tot * 2 + w_tot * 4)      # weights / bias buffers
                   + pb * pm * w_tot * 6)                  # bf16 x + f32 y temporaries
    proj_vmem = min(max(int(1.5 * proj_budget) + (8 << 20), 32 << 20), 100 << 20)
    if vmem_limit_bytes is not None:
        proj_vmem = vmem_limit_bytes
    proj_cost = pl.CostEstimate(
        flops=int(2 * B * M * Cu * w_tot),
        transcendentals=0,
        bytes_accessed=int(B * M * Cu * p_bytes + Cu * w_tot * 2 + w_tot * 4
                           + B * M * w_tot * 2))

    l_bf, h_bf, g_bf = pl.pallas_call(
        functools.partial(_projection_kernel, d_pad=Du),
        out_shape=(jax.ShapeDtypeStruct((B, M, Du), bf16),
                   jax.ShapeDtypeStruct((B, M, Du), bf16),
                   jax.ShapeDtypeStruct((B, M, Cu), bf16)),
        grid=(B // pb, M // pm),
        in_specs=[
            pl.BlockSpec((pb, pm, Cu), lambda b, m: (b, m, 0)),
            # TODO(synk): these weight/bias blocks are grid-invariant; on jax
            # versions supporting pipeline_mode=pl.Buffered(1) they can be
            # single-buffered to save ~Cu*w_tot*2 bytes of dead VMEM at large C.
            pl.BlockSpec((Cu, w_tot), lambda b, m: (0, 0)),
            pl.BlockSpec((1, w_tot), lambda b, m: (0, 0)),
        ],
        out_specs=(pl.BlockSpec((pb, pm, Du), lambda b, m: (b, m, 0)),
                   pl.BlockSpec((pb, pm, Du), lambda b, m: (b, m, 0)),
                   pl.BlockSpec((pb, pm, Cu), lambda b, m: (b, m, 0))),
        compiler_params=pltpu.CompilerParams(
            dimension_semantics=("parallel", "parallel"),
            vmem_limit_bytes=proj_vmem),
        cost_estimate=proj_cost,
    )(p_in, w_lhg, b_lhg)

    # ===================== stage 2: flash attention + residual ================
    n_q = M // block_q
    flash_budget = (2 * (block_b * block_q * Cu * p_bytes      # residual p
                         + block_b * block_q * Du * 2          # l
                         + block_b * block_kv * Du * 2         # h
                         + block_b * block_kv * Cu * 2         # g
                         + block_b * block_q * Cu * p_bytes)   # out
                    + block_b * block_q * (8 + 4 * Cu)         # m, s, acc scratch
                    + 3 * block_b * block_q * block_kv * 4)    # scores / e temporaries
    flash_vmem = min(max(int(1.5 * flash_budget) + (8 << 20), 32 << 20), 100 << 20)
    if vmem_limit_bytes is not None:
        flash_vmem = vmem_limit_bytes
    flash_cost = pl.CostEstimate(
        flops=int(2 * B * M * M * (Du + Cu)),
        transcendentals=int(B * M * M),
        bytes_accessed=int(B * M * Cu * p_bytes              # residual read
                           + B * M * Du * 2                  # l read
                           + n_q * B * M * (Du + Cu) * 2     # h, g re-streamed per q block
                           + B * M * Cu * p_bytes))          # output write

    out_padded = pl.pallas_call(
        _flash_attention_kernel,
        out_shape=jax.ShapeDtypeStruct((B, M, Cu), p.dtype),
        grid=(B // block_b, M // block_q, M // block_kv),
        in_specs=[
            # residual p -- constant across the kv axis (not re-DMA'd per kv step)
            pl.BlockSpec((block_b, block_q, Cu), lambda b, q, k: (b, q, 0)),
            # pre-projected bf16 queries l -- constant across the kv axis
            pl.BlockSpec((block_b, block_q, Du), lambda b, q, k: (b, q, 0)),
            # pre-projected bf16 keys h / values g -- the only per-kv-step DMA
            pl.BlockSpec((block_b, block_kv, Du), lambda b, q, k: (b, k, 0)),
            pl.BlockSpec((block_b, block_kv, Cu), lambda b, q, k: (b, k, 0)),
        ],
        out_specs=pl.BlockSpec((block_b, block_q, Cu), lambda b, q, k: (b, q, 0)),
        scratch_shapes=[
            pltpu.VMEM((block_b, block_q, 1), jnp.float32),    # running max
            pltpu.VMEM((block_b, block_q, 1), jnp.float32),    # running denom
            pltpu.VMEM((block_b, block_q, Cu), jnp.float32),   # output accumulator
        ],
        compiler_params=pltpu.CompilerParams(
            dimension_semantics=("parallel", "parallel", "arbitrary"),
            vmem_limit_bytes=flash_vmem),
        cost_estimate=flash_cost,
    )(p_in, l_bf, h_bf, g_bf)

    return out_padded[:, :, :C] if pad_c else out_padded


def self_attention_ref(p, wh, bh, wl, bl, wg, bg):
    """Plain-JAX (f32) reference matching the PyTorch forward."""
    h = jnp.einsum("bmc,cd->bmd", p, wh) + bh
    l = jnp.einsum("bmc,cd->bmd", p, wl) + bl
    g = jnp.einsum("bmc,ce->bme", p, wg) + bg
    mm = jnp.einsum("bmd,bnd->bmn", l, h)              # l @ h^T
    attn = jax.nn.softmax(mm, axis=-1)
    return p + jnp.einsum("bmn,bnc->bmc", attn, g)


if __name__ == "__main__":
    key = jax.random.PRNGKey(0)
    kp, k1, k2, k3, k4, k5, k6 = jax.random.split(key, 7)

    B, M, C, D = 2, 8, 32, 32
    p = jax.random.normal(kp, (B, M, C), dtype=jnp.float32)
    # Deterministic synthetic Linear params (PyTorch-ish scale).
    wh = jax.random.normal(k1, (C, D), dtype=jnp.float32) * 0.1
    bh = jax.random.normal(k2, (1, D), dtype=jnp.float32) * 0.1
    wl = jax.random.normal(k3, (C, D), dtype=jnp.float32) * 0.1
    bl = jax.random.normal(k4, (1, D), dtype=jnp.float32) * 0.1
    wg = jax.random.normal(k5, (C, C), dtype=jnp.float32) * 0.1
    bg = jax.random.normal(k6, (1, C), dtype=jnp.float32) * 0.1

    out = self_attention(p, wh, bh, wl, bl, wg, bg)
    out = jax.block_until_ready(out)
    ref = self_attention_ref(p, wh, bh, wl, bl, wg, bg)
    assert out.shape == (B, M, C)
    # bf16 matmul inputs (f32 accumulation) -> ~0.5% error vs the f32 reference.
    assert jnp.allclose(out, ref, atol=5e-2, rtol=5e-2), "mismatch vs reference (small)"

    # Exercise the flash-tiled path (multiple query and KV blocks, online softmax).
    M2 = 256
    p2 = jax.random.normal(kp, (B, M2, C), dtype=jnp.float32)
    out2 = self_attention(p2, wh, bh, wl, bl, wg, bg,
                          block_b=1, block_q=128, block_kv=128)
    out2 = jax.block_until_ready(out2)
    ref2 = self_attention_ref(p2, wh, bh, wl, bl, wg, bg)
    assert out2.shape == (B, M2, C)
    assert jnp.allclose(out2, ref2, atol=5e-2, rtol=5e-2), "mismatch vs reference (tiled)"

    # TODO(synk): M_f is None in this configuration; if provided it is one more
    # Linear applied to (p + attention) and could be fused into the finalize step.
    print("KERNEL_OK")
</pallas_src>

<mosaic_0001>
module attributes {stable_mosaic.version = 11 : i64} {
  func.func @_projection_kernel(%arg0: i32, %arg1: i32, %arg2: memref<1x8x128xf32, #tpu.memory_space<vmem>>, %arg3: memref<128x384xbf16, #tpu.memory_space<vmem>>, %arg4: memref<1x384xf32, #tpu.memory_space<vmem>>, %arg5: memref<1x8x128xbf16, #tpu.memory_space<vmem>>, %arg6: memref<1x8x128xbf16, #tpu.memory_space<vmem>>, %arg7: memref<1x8x128xbf16, #tpu.memory_space<vmem>>) attributes {dimension_semantics = [#tpu.dimension_semantics<parallel>, #tpu.dimension_semantics<parallel>], iteration_bounds = array<i64: 2, 1>, scalar_prefetch = 0 : i64, scratch_operands = 0 : i64, tpu.core_type = #tpu.core_type<tc>, window_params = [{transform_indices = @transform_0, window_bounds = array<i64: 1, 8, 128>}, {pipeline_mode = #tpu.pipeline_mode<synchronous>, transform_indices = @transform_1, window_bounds = array<i64: 128, 384>}, {pipeline_mode = #tpu.pipeline_mode<synchronous>, transform_indices = @transform_2, window_bounds = array<i64: 1, 384>}, {transform_indices = @transform_3, window_bounds = array<i64: 1, 8, 128>}, {transform_indices = @transform_4, window_bounds = array<i64: 1, 8, 128>}, {transform_indices = @transform_5, window_bounds = array<i64: 1, 8, 128>}]} {
    %c0 = arith.constant 0 : index
    %c0_0 = arith.constant 0 : index
    %c0_1 = arith.constant 0 : index
    %0 = vector.load %arg2[%c0, %c0_0, %c0_1] : memref<1x8x128xf32, #tpu.memory_space<vmem>>, vector<1x8x128xf32>
    %1 = vector.shape_cast %0 : vector<1x8x128xf32> to vector<8x128xf32>
    %2 = arith.truncf %1 : vector<8x128xf32> to vector<8x128xbf16>
    %c0_2 = arith.constant 0 : index
    %c0_3 = arith.constant 0 : index
    %3 = vector.load %arg3[%c0_2, %c0_3] : memref<128x384xbf16, #tpu.memory_space<vmem>>, vector<128x384xbf16>
    %cst = arith.constant dense<0.000000e+00> : vector<8x384xf32>
    %4 = tpu.matmul %2, %3, %cst {dimension_numbers = #tpu.dot_dimension_numbers<[1], [0], [0], [1], [0, 0, 1, 1], [], []>} : vector<8x128xbf16>, vector<128x384xbf16>, vector<8x384xf32> -> vector<8x384xf32>
    %c0_4 = arith.constant 0 : index
    %c0_5 = arith.constant 0 : index
    %5 = vector.load %arg4[%c0_4, %c0_5] : memref<1x384xf32, #tpu.memory_space<vmem>>, vector<1x384xf32>
    %6 = vector.broadcast %5 : vector<1x384xf32> to vector<8x384xf32>
    %7 = arith.addf %4, %6 : vector<8x384xf32>
    %8 = arith.truncf %7 : vector<8x384xf32> to vector<8x384xbf16>
    %9 = vector.extract_strided_slice %8 {offsets = [0, 0], sizes = [8, 128], strides = [1, 1]} : vector<8x384xbf16> to vector<8x128xbf16>
    %10 = vector.shape_cast %9 : vector<8x128xbf16> to vector<1x8x128xbf16>
    %c0_6 = arith.constant 0 : index
    %c0_7 = arith.constant 0 : index
    %c0_8 = arith.constant 0 : index
    %11 = vector.load %arg5[%c0_6, %c0_7, %c0_8] : memref<1x8x128xbf16, #tpu.memory_space<vmem>>, vector<1x8x128xbf16>
    tpu.vector_store %arg5[%c0_6, %c0_7, %c0_8], %10 {strides = array<i32>} : memref<1x8x128xbf16, #tpu.memory_space<vmem>>, vector<1x8x128xbf16>,
    %12 = vector.extract_strided_slice %8 {offsets = [0, 128], sizes = [8, 128], strides = [1, 1]} : vector<8x384xbf16> to vector<8x128xbf16>
    %13 = vector.shape_cast %12 : vector<8x128xbf16> to vector<1x8x128xbf16>
    %c0_9 = arith.constant 0 : index
    %c0_10 = arith.constant 0 : index
    %c0_11 = arith.constant 0 : index
    %14 = vector.load %arg6[%c0_9, %c0_10, %c0_11] : memref<1x8x128xbf16, #tpu.memory_space<vmem>>, vector<1x8x128xbf16>
    tpu.vector_store %arg6[%c0_9, %c0_10, %c0_11], %13 {strides = array<i32>} : memref<1x8x128xbf16, #tpu.memory_space<vmem>>, vector<1x8x128xbf16>,
    %15 = vector.extract_strided_slice %8 {offsets = [0, 256], sizes = [8, 128], strides = [1, 1]} : vector<8x384xbf16> to vector<8x128xbf16>
    %16 = vector.shape_cast %15 : vector<8x128xbf16> to vector<1x8x128xbf16>
    %c0_12 = arith.constant 0 : index
    %c0_13 = arith.constant 0 : index
    %c0_14 = arith.constant 0 : index
    %17 = vector.load %arg7[%c0_12, %c0_13, %c0_14] : memref<1x8x128xbf16, #tpu.memory_space<vmem>>, vector<1x8x128xbf16>
    tpu.vector_store %arg7[%c0_12, %c0_13, %c0_14], %16 {strides = array<i32>} : memref<1x8x128xbf16, #tpu.memory_space<vmem>>, vector<1x8x128xbf16>,
    return
  }
  func.func @transform_0(%arg0: i32, %arg1: i32) -> (i32, i32, i32) {
    %c0_i32 = arith.constant 0 : i32
    %c0_i32_0 = arith.constant 0 : i32
    return %arg0, %arg1, %c0_i32 : i32, i32, i32
  }
  func.func @transform_1(%arg0: i32, %arg1: i32) -> (i32, i32) {
    %c0_i32 = arith.constant 0 : i32
    %c0_i32_0 = arith.constant 0 : i32
    %c0_i32_1 = arith.constant 0 : i32
    return %c0_i32, %c0_i32_0 : i32, i32
  }
  func.func @transform_2(%arg0: i32, %arg1: i32) -> (i32, i32) {
    %c0_i32 = arith.constant 0 : i32
    %c0_i32_0 = arith.constant 0 : i32
    %c0_i32_1 = arith.constant 0 : i32
    return %c0_i32, %c0_i32_0 : i32, i32
  }
  func.func @transform_3(%arg0: i32, %arg1: i32) -> (i32, i32, i32) {
    %c0_i32 = arith.constant 0 : i32
    %c0_i32_0 = arith.constant 0 : i32
    return %arg0, %arg1, %c0_i32 : i32, i32, i32
  }
  func.func @transform_4(%arg0: i32, %arg1: i32) -> (i32, i32, i32) {
    %c0_i32 = arith.constant 0 : i32
    %c0_i32_0 = arith.constant 0 : i32
    return %arg0, %arg1, %c0_i32 : i32, i32, i32
  }
  func.func @transform_5(%arg0: i32, %arg1: i32) -> (i32, i32, i32) {
    %c0_i32 = arith.constant 0 : i32
    %c0_i32_0 = arith.constant 0 : i32
    return %arg0, %arg1, %c0_i32 : i32, i32, i32
  }
}

</mosaic_0001>

<llo_original>
// kernel: tpu_custom_call.1
$region0: #{tpu_custom_call.1}
  #allocation0 [shape = 'u32[]', space=smem, size = 0x4, offset = 0x4, fixed_abs, tag = 'smem constant byte address 0x4 - core index']
  #allocation1 [shape = 'u32[144,128]{1,0:T(1,128)}', space=vmem, size = 0x12000, scoped, tag = 'internal scratch']
  %s0 = inlined_call_operand.hbm [shape: f32[2,8,128], index: 0, kind: input, shape index: {}]
  %s1 = inlined_call_operand.hbm [shape: bf16[128,384], index: 1, kind: input, shape index: {}]
  %s2 = inlined_call_operand.vmem [shape: f32[1,384], index: 2, kind: input, shape index: {}]
  %s3 = inlined_call_operand.hbm [shape: bf16[2,8,128], index: 3, kind: output, shape index: {0}]
  %s4 = inlined_call_operand.hbm [shape: bf16[2,8,128], index: 4, kind: output, shape index: {1}]
  %s5 = inlined_call_operand.hbm [shape: bf16[2,8,128], index: 5, kind: output, shape index: {2}]
  %6 = xla_tuple %s3, %s4, %s5
  %s7 = sld [smem:[#allocation0]]
  $region69: #{tpu_custom_call.1} parent=0
    _
  %s9 = ssub.s32 1, %s7
  %s10 = scalar_select 0, %s9, %s7
  $region1: #{tpu_custom_call.1} parent=0
    #allocation2 [shape = 'u8[8192]{0}', space=vmem, size = 0x2000, scoped, tag = 'input window, operand 0']
    #allocation3 [shape = 's32[2]{0}', space=sflag, size = 0x8, scoped, tag = 'scoped memory for tpu_custom_call.1']
    #allocation4 [shape = 's32[2]{0}', space=sflag, size = 0x8, scoped, tag = 'scoped memory for tpu_custom_call.1']
    #allocation5 [shape = 'u8[98304]{0}', space=vmem, size = 0x18000, scoped, tag = 'input window, operand 1, single buffered']
    #allocation6 [shape = 's32[1]{0}', space=sflag, size = 0x4, scoped, tag = 'scoped memory for tpu_custom_call.1']
    #allocation7 [shape = 'u8[4096]{0}', space=vmem, size = 0x1000, scoped, tag = 'output window, operand 0']
    #allocation8 [shape = 'u8[4096]{0}', space=vmem, size = 0x1000, scoped, tag = 'output window, operand 1']
    #allocation9 [shape = 's32[2]{0}', space=sflag, size = 0x8, scoped, tag = 'scoped memory for tpu_custom_call.1']
    #allocation10 [shape = 'u8[4096]{0}', space=vmem, size = 0x1000, scoped, tag = 'output window, operand 2']
    %11 = vsyncpa [#allocation3], 0
    %s12 = scalar_lea.sflag [#allocation3], 1
    %13 = vsyncpa %s12, 0
    %14 = vsyncpa [#allocation6], 0
    %15 = vsyncpa [#allocation4], 0
    %s16 = scalar_lea.sflag [#allocation4], 1
    %17 = vsyncpa %s16, 0
    %18 = vsyncpa [#allocation9], 0
    %s19 = scalar_lea.sflag [#allocation9], 1
    %20 = vsyncpa %s19, 0
    loop: start=0, step=1, limit=4
    $region2: #{tpu_custom_call.1} parent=1 // loop_pre_header
      _
    $region3: #{tpu_custom_call.1} parent=1 // loop_header
      %s22 = sphi 0, %s26
      %p23 = scmp.ge.s32.totalorder %s22, 4
      %s29 = sphi 0, %s41
      %s30 = sphi 0, %s37
      %s31 = sphi 0, %s29
      %s32 = sphi 0, %s30
      %s33 = sphi 0, %s31
      %s34 = sphi 0, %s32
      %s46 = sphi 0, %s48
      %s49 = sphi 0, %s46
      %s50 = sphi 0, %s49
      %s66 = sphi 0, %s50
      %s70 = sphi 0, %s70
      %s72 = sphi 0, %s70
      %s73 = sphi 0, %s72
      %s87 = sphi 0, %s73
      %s91 = sphi 0, %s91
      %s93 = sphi 0, %s91
      %s94 = sphi 0, %s93
      %s108 = sphi 0, %s94
      %s116 = sphi 0, %s118
      %s119 = sphi 0, %s116
      %s120 = sphi 0, %s119
      %s136 = sphi 0, %s120
      %s144 = sphi 0, %s146
      %s147 = sphi 0, %s144
      %s148 = sphi 0, %s147
      %s164 = sphi 0, %s148
      %s172 = sphi 0, %s174
      %s175 = sphi 0, %s172
      %s176 = sphi 0, %s175
      %s192 = sphi 0, %s176
    $region4: #{tpu_custom_call.1} parent=1 // loop_header_branch
      %25 = sbr.rel (%p23) target = $region8
    $region5: #{tpu_custom_call.1} parent=1 // loop_body
      %s27 = ssub.s32 %s22, 1
      %s28 = ssub.s32 %s22, 2
      %s35 = sadd.s32 1, %s30
      %p36 = scmp.ge.s32.totalorder %s35, 1
      %s37 = scalar_select %p36, 0, %s35
      %s38 = sadd.s32 1, %s29
      %s39 = scalar_select %p36, %s38, %s29
      %p40 = scmp.ge.s32.totalorder %s39, 2
      %s41 = scalar_select %p40, 0, %s39
      %s42 = ssub.s32 %s29, %s41
      %s43 = ssub.s32 %s30, %s37
      %s44 = sor.u32 %s42, %s43
      %p45 = scmp.eq.s32.totalorder %s44, 0
      %s47 = sadd.s32 %s46, 1
      %s48 = scalar_select %p45, %s46, %s47
      %p51 = pneg %p45
      %p52 = scmp.eq.s32.totalorder %s22, 1
      %p53 = por %p51, %p52
      %p54 = scmp.ne.s32.totalorder %s46, %s49
      %p55 = scmp.eq.s32.totalorder %s22, 0
      %p56 = por %p54, %p55
      %p57 = scmp.ne.s32.totalorder %s46, %s49
      %p58 = scmp.eq.s32.totalorder %s27, 1
      %p59 = por %p57, %p58
      %p60 = scmp.ne.s32.totalorder %s49, %s50
      %p61 = scmp.eq.s32.totalorder %s27, 0
      %p62 = por %p60, %p61
      %p63 = scmp.ne.s32.totalorder %s49, %s50
      %p64 = scmp.eq.s32.totalorder %s28, 1
      %p65 = por %p63, %p64
      %p67 = scmp.ne.s32.totalorder %s50, %s66
      %p68 = scmp.eq.s32.totalorder %s28, 0
      %p69 = por %p67, %p68
      %s71 = sadd.s32 %s70, 1
      %p74 = scmp.eq.s32.totalorder %s22, 1
      %p75 = scmp.ne.s32.totalorder %s70, %s72
      %p76 = scmp.eq.s32.totalorder %s22, 0
      %p77 = por %p75, %p76
      %p78 = scmp.ne.s32.totalorder %s70, %s72
      %p79 = scmp.eq.s32.totalorder %s27, 1
      %p80 = por %p78, %p79
      %p81 = scmp.ne.s32.totalorder %s72, %s73
      %p82 = scmp.eq.s32.totalorder %s27, 0
      %p83 = por %p81, %p82
      %p84 = scmp.ne.s32.totalorder %s72, %s73
      %p85 = scmp.eq.s32.totalorder %s28, 1
      %p86 = por %p84, %p85
      %p88 = scmp.ne.s32.totalorder %s73, %s87
      %p89 = scmp.eq.s32.totalorder %s28, 0
      %p90 = por %p88, %p89
      %s92 = sadd.s32 %s91, 1
      %p95 = scmp.eq.s32.totalorder %s22, 1
      %p96 = scmp.ne.s32.totalorder %s91, %s93
      %p97 = scmp.eq.s32.totalorder %s22, 0
      %p98 = por %p96, %p97
      %p99 = scmp.ne.s32.totalorder %s91, %s93
      %p100 = scmp.eq.s32.totalorder %s27, 1
      %p101 = por %p99, %p100
      %p102 = scmp.ne.s32.totalorder %s93, %s94
      %p103 = scmp.eq.s32.totalorder %s27, 0
      %p104 = por %p102, %p103
      %p105 = scmp.ne.s32.totalorder %s93, %s94
      %p106 = scmp.eq.s32.totalorder %s28, 1
      %p107 = por %p105, %p106
      %p109 = scmp.ne.s32.totalorder %s94, %s108
      %p110 = scmp.eq.s32.totalorder %s28, 0
      %p111 = por %p109, %p110
      %s112 = ssub.s32 %s29, %s41
      %s113 = ssub.s32 %s30, %s37
      %s114 = sor.u32 %s112, %s113
      %p115 = scmp.eq.s32.totalorder %s114, 0
      %s117 = sadd.s32 %s116, 1
      %s118 = scalar_select %p115, %s116, %s117
      %p121 = pneg %p115
      %p122 = scmp.eq.s32.totalorder %s22, 1
      %p123 = por %p121, %p122
      %p124 = scmp.ne.s32.totalorder %s116, %s119
      %p125 = scmp.eq.s32.totalorder %s22, 0
      %p126 = por %p124, %p125
      %p127 = scmp.ne.s32.totalorder %s116, %s119
      %p128 = scmp.eq.s32.totalorder %s27, 1
      %p129 = por %p127, %p128
      %p130 = scmp.ne.s32.totalorder %s119, %s120
      %p131 = scmp.eq.s32.totalorder %s27, 0
      %p132 = por %p130, %p131
      %p133 = scmp.ne.s32.totalorder %s119, %s120
      %p134 = scmp.eq.s32.totalorder %s28, 1
      %p135 = por %p133, %p134
      %p137 = scmp.ne.s32.totalorder %s120, %s136
      %p138 = scmp.eq.s32.totalorder %s28, 0
      %p139 = por %p137, %p138
      %s140 = ssub.s32 %s29, %s41
      %s141 = ssub.s32 %s30, %s37
      %s142 = sor.u32 %s140, %s141
      %p143 = scmp.eq.s32.totalorder %s142, 0
      %s145 = sadd.s32 %s144, 1
      %s146 = scalar_select %p143, %s144, %s145
      %p149 = pneg %p143
      %p150 = scmp.eq.s32.totalorder %s22, 1
      %p151 = por %p149, %p150
      %p152 = scmp.ne.s32.totalorder %s144, %s147
      %p153 = scmp.eq.s32.totalorder %s22, 0
      %p154 = por %p152, %p153
      %p155 = scmp.ne.s32.totalorder %s144, %s147
      %p156 = scmp.eq.s32.totalorder %s27, 1
      %p157 = por %p155, %p156
      %p158 = scmp.ne.s32.totalorder %s147, %s148
      %p159 = scmp.eq.s32.totalorder %s27, 0
      %p160 = por %p158, %p159
      %p161 = scmp.ne.s32.totalorder %s147, %s148
      %p162 = scmp.eq.s32.totalorder %s28, 1
      %p163 = por %p161, %p162
      %p165 = scmp.ne.s32.totalorder %s148, %s164
      %p166 = scmp.eq.s32.totalorder %s28, 0
      %p167 = por %p165, %p166
      %s168 = ssub.s32 %s29, %s41
      %s169 = ssub.s32 %s30, %s37
      %s170 = sor.u32 %s168, %s169
      %p171 = scmp.eq.s32.totalorder %s170, 0
      %s173 = sadd.s32 %s172, 1
      %s174 = scalar_select %p171, %s172, %s173
      %p177 = pneg %p171
      %p178 = scmp.eq.s32.totalorder %s22, 1
      %p179 = por %p177, %p178
      %p180 = scmp.ne.s32.totalorder %s172, %s175
      %p181 = scmp.eq.s32.totalorder %s22, 0
      %p182 = por %p180, %p181
      %p183 = scmp.ne.s32.totalorder %s172, %s175
      %p184 = scmp.eq.s32.totalorder %s27, 1
      %p185 = por %p183, %p184
      %p186 = scmp.ne.s32.totalorder %s175, %s176
      %p187 = scmp.eq.s32.totalorder %s27, 0
      %p188 = por %p186, %p187
      %p189 = scmp.ne.s32.totalorder %s175, %s176
      %p190 = scmp.eq.s32.totalorder %s28, 1
      %p191 = por %p189, %p190
      %p193 = scmp.ne.s32.totalorder %s176, %s192
      %p194 = scmp.eq.s32.totalorder %s28, 0
      %p195 = por %p193, %p194
      %p196 = scmp.le.s32.totalorder 1, %s22
      %p197 = scmp.lt.s32.totalorder %s22, 3
      %p198 = pnand %p196, %p197
      %p199 = pneg %p198
      // Predicated region
      $region9: #{tpu_custom_call.1} parent=5 // pred_check
        _
      $region10: #{tpu_custom_call.1} parent=5 // pred_check_branch
        %201 = sbr.rel (%p198) target = $region12
      $region11: #{tpu_custom_call.1} parent=5 // pred_region
        %s202 = ssub.s32 %s22, 1
        // Predicated region
        $region13: #{tpu_custom_call.1} parent=11 // pred_check
          %p203 = pneg %p83
        $region14: #{tpu_custom_call.1} parent=11 // pred_check_branch
          %205 = sbr.rel (%p203) target = $region16
        $region15: #{tpu_custom_call.1} parent=11 // pred_region
          %s207 = ssub.s32 3072, 3072
          %208 = vsyncadd [#allocation6], %s207
          %s209 = sshll.u32 [#allocation5], 4
          %s210 = int_to_ptr.vmem [resolvable:$true] %s209
          %215 = dma.hbm_to_vmem [thread:$0]  %s1, 3072, %s210, [#allocation6], 192, 192, 12
        $region16: #{tpu_custom_call.1} parent=11 // pred_fallthru
          _
        // Predicated region
        $region17: #{tpu_custom_call.1} parent=11 // pred_check
          %p216 = pneg %p104
        $region18: #{tpu_custom_call.1} parent=11 // pred_check_branch
          %218 = sbr.rel (%p216) target = $region20
        $region19: #{tpu_custom_call.1} parent=11 // pred_region
          _
        $region20: #{tpu_custom_call.1} parent=11 // pred_fallthru
          _
      $region12: #{tpu_custom_call.1} parent=5 // pred_fallthru
        _
      %p219 = scmp.lt.s32.totalorder %s22, 2
      // Predicated region
      $region21: #{tpu_custom_call.1} parent=5 // pred_check
        %p220 = pneg %p219
      $region22: #{tpu_custom_call.1} parent=5 // pred_check_branch
        %222 = sbr.rel (%p220) target = $region24
      $region23: #{tpu_custom_call.1} parent=5 // pred_region
        // Predicated region
        $region25: #{tpu_custom_call.1} parent=23 // pred_check
          %p223 = pneg %p56
        $region26: #{tpu_custom_call.1} parent=23 // pred_check_branch
          %225 = sbr.rel (%p223) target = $region28
        $region27: #{tpu_custom_call.1} parent=23 // pred_region
          %s226 = sand.u32 %s46, 1
          %s227 = scalar_lea.sflag [#allocation3], %s226
          %s228 = sand.u32 %s46, 1
          %s229 = smul.addr %s228, 8
          %s230 = scalar_lea.vmem [#allocation2], %s229
          %s232 = ssub.s32 128, 128
          %233 = vsyncadd %s227, %s232
          %s234 = sadd.s32 %s30, %s29
          %s235 = smul.addr %s234, 128
          %s236 = scalar_lea.hbm %s0, %s235
          %s238 = sshll.u32 %s230, 4
          %s239 = int_to_ptr.vmem [resolvable:$true] %s238
          %241 = dma.hbm_to_vmem [thread:$0]  %s236, 128, %s239, %s227
        $region28: #{tpu_custom_call.1} parent=23 // pred_fallthru
          _
      $region24: #{tpu_custom_call.1} parent=5 // pred_fallthru
        _
      %p242 = scmp.le.s32.totalorder 1, %s22
      %p243 = scmp.lt.s32.totalorder %s22, 3
      %p244 = pnand %p242, %p243
      %p245 = pneg %p244
      // Predicated region
      $region29: #{tpu_custom_call.1} parent=5 // pred_check
        _
      $region30: #{tpu_custom_call.1} parent=5 // pred_check_branch
        %247 = sbr.rel (%p244) target = $region32
      $region31: #{tpu_custom_call.1} parent=5 // pred_region
        %s248 = ssub.s32 %s22, 1
        %s249 = sand.u32 %s49, 1
        %s250 = scalar_lea.sflag [#allocation3], %s249
        %s251 = sand.u32 %s49, 1
        %s252 = smul.addr %s251, 8
        %s253 = scalar_lea.vmem [#allocation2], %s252
        // Predicated region
        $region33: #{tpu_custom_call.1} parent=31 // pred_check
          %p254 = pneg %p62
        $region34: #{tpu_custom_call.1} parent=31 // pred_check_branch
          %256 = sbr.rel (%p254) target = $region36
        $region35: #{tpu_custom_call.1} parent=31 // pred_region
          %257 = dma.done %s250, 128
        $region36: #{tpu_custom_call.1} parent=31 // pred_fallthru
          _
        // Predicated region
        $region37: #{tpu_custom_call.1} parent=31 // pred_check
          %p258 = pneg %p83
        $region38: #{tpu_custom_call.1} parent=31 // pred_check_branch
          %260 = sbr.rel (%p258) target = $region40
        $region39: #{tpu_custom_call.1} parent=31 // pred_region
          %261 = dma.done [#allocation6], 3072
        $region40: #{tpu_custom_call.1} parent=31 // pred_fallthru
          _
        %s262 = sand.u32 %s49, 1
        %s263 = scalar_lea.sflag [#allocation3], %s262
        %s264 = sand.u32 %s49, 1
        %s265 = smul.addr %s264, 8
        %s266 = scalar_lea.vmem [#allocation2], %s265
        %p267 = pneg %p62
        %p268 = pneg %p59
        %p269 = pneg %p83
        %p270 = pneg %p80
        %p271 = pneg %p104
        %p272 = pneg %p101
        %p273 = pneg %p132
        %p274 = pneg %p129
        %s275 = sand.u32 %s119, 1
        %s276 = scalar_lea.sflag [#allocation4], %s275
        %s277 = sand.u32 %s119, 1
        %s278 = smul.addr %s277, 4
        %s279 = scalar_lea.vmem [#allocation7], %s278
        %p280 = pneg %p160
        %p281 = pneg %p157
        %s282 = sand.u32 %s27, 1
        %s283 = scalar_lea.sflag [#allocation9], %s282
        %s284 = sand.u32 %s147, 1
        %s285 = smul.addr %s284, 4
        %s286 = scalar_lea.vmem [#allocation8], %s285
        %p287 = pneg %p188
        %p288 = pneg %p185
        %s289 = sand.u32 %s27, 1
        %s290 = scalar_lea.sflag [#allocation9], %s289
        %s291 = sand.u32 %s175, 1
        %s292 = smul.addr %s291, 4
        %s293 = scalar_lea.vmem [#allocation10], %s292
        %v295 = vld [vmem:[%s253] sm:$0xff]
        %v296 = vpack.c.bf16 %v295, %v295
        %v297 = vld [vmem:[#allocation5] sm:$0xff]
        %v298 = vld [vmem:[#allocation5 + $0x8] sm:$0xf]
        %v299 = vld [vmem:[#allocation5 + $0xc] sm:$0xff]
        %v300 = vld [vmem:[#allocation5 + $0x14] sm:$0xf]
        %v301 = vld [vmem:[#allocation5 + $0x18] sm:$0xff]
        %v302 = vld [vmem:[#allocation5 + $0x20] sm:$0xf]
        %v303 = vld [vmem:[#allocation5 + $0x24] sm:$0xff]
        %v304 = vld [vmem:[#allocation5 + $0x2c] sm:$0xf]
        %v305 = vld [vmem:[#allocation5 + $0x30] sm:$0xff]
        %v306 = vld [vmem:[#allocation5 + $0x38] sm:$0xf]
        %v307 = vld [vmem:[#allocation5 + $0x3c] sm:$0xff]
        %v308 = vld [vmem:[#allocation5 + $0x44] sm:$0xf]
        %v309 = vld [vmem:[#allocation5 + $0x48] sm:$0xff]
        %v310 = vld [vmem:[#allocation5 + $0x50] sm:$0xf]
        %v311 = vld [vmem:[#allocation5 + $0x54] sm:$0xff]
        %v312 = vld [vmem:[#allocation5 + $0x5c] sm:$0xf]
        %v313 = vld [vmem:[#allocation5 + $0x60] sm:$0xff]
        %v314 = vld [vmem:[#allocation5 + $0x68] sm:$0xf]
        %v315 = vld [vmem:[#allocation5 + $0x6c] sm:$0xff]
        %v316 = vld [vmem:[#allocation5 + $0x74] sm:$0xf]
        %v317 = vld [vmem:[#allocation5 + $0x78] sm:$0xff]
        %v318 = vld [vmem:[#allocation5 + $0x80] sm:$0xf]
        %v319 = vld [vmem:[#allocation5 + $0x84] sm:$0xff]
        %v320 = vld [vmem:[#allocation5 + $0x8c] sm:$0xf]
        %v321 = vld [vmem:[#allocation5 + $0x90] sm:$0xff]
        %v322 = vld [vmem:[#allocation5 + $0x98] sm:$0xf]
        %v323 = vld [vmem:[#allocation5 + $0x9c] sm:$0xff]
        %v324 = vld [vmem:[#allocation5 + $0xa4] sm:$0xf]
        %v325 = vld [vmem:[#allocation5 + $0xa8] sm:$0xff]
        %v326 = vld [vmem:[#allocation5 + $0xb0] sm:$0xf]
        %v327 = vld [vmem:[#allocation5 + $0xb4] sm:$0xff]
        %v328 = vld [vmem:[#allocation5 + $0xbc] sm:$0xf]
        %v329 = vld [vmem:[%s2] sm:$0x7]
        %v331 = vlaneseq
        %v332 = vshrl.u32 %v331, 7
        %v333 = vsub.s32 0, %v332
        %v334 = vrot.slane %v329, %v333
        %v335 = vlaneseq
        %v336 = vshrl.u32 %v335, 7
        %v337 = vsub.s32 1, %v336
        %v338 = vrot.slane %v329, %v337
        %v339 = vlaneseq
        %v340 = vshrl.u32 %v339, 7
        %v341 = vsub.s32 2, %v340
        %v342 = vrot.slane %v329, %v341
        %v378 = vunpack.c.l.b16 %v297
        %v379 = vunpack.c.h.b16 %v297
        %v380 = vunpack.c.l.b16 %v298
        %v381 = vunpack.c.l.b16 %v299
        %v382 = vunpack.c.h.b16 %v299
        %v383 = vunpack.c.l.b16 %v300
        %v384 = vunpack.c.l.b16 %v301
        %v385 = vunpack.c.h.b16 %v301
        %v386 = vunpack.c.l.b16 %v302
        %v387 = vunpack.c.l.b16 %v303
        %v388 = vunpack.c.h.b16 %v303
        %v389 = vunpack.c.l.b16 %v304
        %v390 = vunpack.c.l.b16 %v305
        %v391 = vunpack.c.h.b16 %v305
        %v392 = vunpack.c.l.b16 %v306
        %v393 = vunpack.c.l.b16 %v307
        %v394 = vunpack.c.h.b16 %v307
        %v395 = vunpack.c.l.b16 %v308
        %v396 = vunpack.c.l.b16 %v309
        %v397 = vunpack.c.h.b16 %v309
        %v398 = vunpack.c.l.b16 %v310
        %v399 = vunpack.c.l.b16 %v311
        %v400 = vunpack.c.h.b16 %v311
        %v401 = vunpack.c.l.b16 %v312
        %v402 = vunpack.c.l.b16 %v313
        %v403 = vunpack.c.h.b16 %v313
        %v404 = vunpack.c.l.b16 %v314
        %v405 = vunpack.c.l.b16 %v315
        %v406 = vunpack.c.h.b16 %v315
        %v407 = vunpack.c.l.b16 %v316
        %v408 = vunpack.c.l.b16 %v317
        %v409 = vunpack.c.h.b16 %v317
        %v410 = vunpack.c.l.b16 %v318
        %v411 = vunpack.c.l.b16 %v319
        %v412 = vunpack.c.h.b16 %v319
        %v413 = vunpack.c.l.b16 %v320
        %v414 = vunpack.c.l.b16 %v321
        %v415 = vunpack.c.h.b16 %v321
        %v416 = vunpack.c.l.b16 %v322
        %v417 = vunpack.c.l.b16 %v323
        %v418 = vunpack.c.h.b16 %v323
        %v419 = vunpack.c.l.b16 %v324
        %v420 = vunpack.c.l.b16 %v325
        %v421 = vunpack.c.h.b16 %v325
        %v422 = vunpack.c.l.b16 %v326
        %v423 = vunpack.c.l.b16 %v327
        %v424 = vunpack.c.h.b16 %v327
        %v425 = vunpack.c.l.b16 %v328
        %v426 = vpack.c.b16 %v381, %v378
        %v427 = vpack.c.b16 %v382, %v379
        %v428 = vpack.c.b16 %v383, %v380
        %v429 = vpack.c.b16 %v387, %v384
        %v430 = vpack.c.b16 %v388, %v385
        %v431 = vpack.c.b16 %v389, %v386
        %v432 = vpack.c.b16 %v393, %v390
        %v433 = vpack.c.b16 %v394, %v391
        %v434 = vpack.c.b16 %v395, %v392
        %v435 = vpack.c.b16 %v399, %v396
        %v436 = vpack.c.b16 %v400, %v397
        %v437 = vpack.c.b16 %v401, %v398
        %v438 = vpack.c.b16 %v405, %v402
        %v439 = vpack.c.b16 %v406, %v403
        %v440 = vpack.c.b16 %v407, %v404
        %v441 = vpack.c.b16 %v411, %v408
        %v442 = vpack.c.b16 %v412, %v409
        %v443 = vpack.c.b16 %v413, %v410
        %v444 = vpack.c.b16 %v417, %v414
        %v445 = vpack.c.b16 %v418, %v415
        %v446 = vpack.c.b16 %v419, %v416
        %v447 = vpack.c.b16 %v423, %v420
        %v448 = vpack.c.b16 %v424, %v421
        %v449 = vpack.c.b16 %v425, %v422
        %474 = vmatprep.subr.bf16.mxu0 %v427
        %475 = vmatpush1.bf16.msra.mxu0 %v426
        %476 = vmatprep.subr.bf16.mxu0 %v430
        %477 = vmatpush1.bf16.msra.mxu0 %v429
        %478 = vmatprep.subr.bf16.mxu0 %v433
        %479 = vmatpush1.bf16.msra.mxu0 %v432
        %480 = vmatprep.subr.bf16.mxu0 %v436
        %481 = vmatpush1.bf16.msra.mxu0 %v435
        %482 = vmatprep.subr.bf16.mxu0 %v439
        %483 = vmatpush1.bf16.msra.mxu0 %v438
        %484 = vmatprep.subr.bf16.mxu0 %v442
        %485 = vmatpush1.bf16.msra.mxu0 %v441
        %486 = vmatprep.subr.bf16.mxu0 %v445
        %487 = vmatpush1.bf16.msra.mxu0 %v444
        %488 = vmatprep.subr.bf16.mxu0 %v448
        %489 = vmatpush1.bf16.msra.mxu0 %v447
        %490 = vmatprep.subr.bf16.mxu0 0
        %491 = vmatpush1.bf16.msra.mxu0 0
        %492 = vmatprep.subr.bf16.mxu0 0
        %493 = vmatpush1.bf16.msra.mxu0 0
        %494 = vmatprep.subr.bf16.mxu0 0
        %495 = vmatpush1.bf16.msra.mxu0 0
        %496 = vmatprep.subr.bf16.mxu0 0
        %497 = vmatpush1.bf16.msra.mxu0 0
        %498 = vmatprep.subr.bf16.mxu0 0
        %499 = vmatpush1.bf16.msra.mxu0 0
        %500 = vmatprep.subr.bf16.mxu0 0
        %501 = vmatpush1.bf16.msra.mxu0 0
        %502 = vmatprep.subr.bf16.mxu0 0
        %503 = vmatpush1.bf16.msra.mxu0 0
        %504 = vmatprep.subr.bf16.mxu0 0
        %505 = vmatpush1.bf16.msra.mxu0 0
        %506 = vmatprep.mubr.bf16.mxu0 0
        %507 = vmatmul.mubr.bf16.gmra.mrb[0].mxu0 %v296
        %v508 = vpop.f32.mrb[0].mxu0
        %v509 = vadd.f32 %v334, %v508
        %v510 = vpop.f32.mrb[0].mxu0
        %v511 = vadd.f32 %v338, %v510
        %v512 = vpop.f32.mrb[0].mxu0
        %v513 = vpop.f32.mrb[0].mxu0
        %514 = vdwg.mxu0
        %515 = vmatprep.subr.bf16.mxu0 0
        %516 = vmatpush1.bf16.msra.mxu0 %v428
        %517 = vmatprep.subr.bf16.mxu0 0
        %518 = vmatpush1.bf16.msra.mxu0 %v431
        %519 = vmatprep.subr.bf16.mxu0 0
        %520 = vmatpush1.bf16.msra.mxu0 %v434
        %521 = vmatprep.subr.bf16.mxu0 0
        %522 = vmatpush1.bf16.msra.mxu0 %v437
        %523 = vmatprep.subr.bf16.mxu0 0
        %524 = vmatpush1.bf16.msra.mxu0 %v440
        %525 = vmatprep.subr.bf16.mxu0 0
        %526 = vmatpush1.bf16.msra.mxu0 %v443
        %527 = vmatprep.subr.bf16.mxu0 0
        %528 = vmatpush1.bf16.msra.mxu0 %v446
        %529 = vmatprep.subr.bf16.mxu0 0
        %530 = vmatpush1.bf16.msra.mxu0 %v449
        %531 = vmatprep.subr.bf16.mxu0 0
        %532 = vmatpush1.bf16.msra.mxu0 0
        %533 = vmatprep.subr.bf16.mxu0 0
        %534 = vmatpush1.bf16.msra.mxu0 0
        %535 = vmatprep.subr.bf16.mxu0 0
        %536 = vmatpush1.bf16.msra.mxu0 0
        %537 = vmatprep.subr.bf16.mxu0 0
        %538 = vmatpush1.bf16.msra.mxu0 0
        %539 = vmatprep.subr.bf16.mxu0 0
        %540 = vmatpush1.bf16.msra.mxu0 0
        %541 = vmatprep.subr.bf16.mxu0 0
        %542 = vmatpush1.bf16.msra.mxu0 0
        %543 = vmatprep.subr.bf16.mxu0 0
        %544 = vmatpush1.bf16.msra.mxu0 0
        %545 = vmatprep.subr.bf16.mxu0 0
        %546 = vmatpush1.bf16.msra.mxu0 0
        %547 = vmatprep.mubr.bf16.mxu0 0
        %548 = vmatmul.mubr.bf16.gmra.mrb[0].mxu0 %v296
        %v549 = vpop.f32.mrb[0].mxu0
        %v550 = vadd.f32 %v342, %v549
        %v551 = vpop.f32.mrb[0].mxu0
        %v552 = vpop.f32.mrb[0].mxu0
        %v553 = vpop.f32.mrb[0].mxu0
        %554 = vdwg.mxu0
        %v555 = vpack.c.bf16 %v509, %v509
        %v556 = vpack.c.bf16 %v511, %v511
        %v557 = vpack.c.bf16 %v550, %v550
        %558 = vst [vmem:[%s279] sm:$0xf] %v555
        %559 = vst [vmem:[%s286] sm:$0xf] %v556
        %560 = vst [vmem:[%s293] sm:$0xf] %v557
        %s561 = sand.u32 %s119, 1
        %s562 = scalar_lea.sflag [#allocation4], %s561
        %s563 = sand.u32 %s119, 1
        %s564 = smul.addr %s563, 4
        %s565 = scalar_lea.vmem [#allocation7], %s564
        %s566 = sand.u32 %s27, 1
        %s567 = scalar_lea.sflag [#allocation9], %s566
        %s568 = sand.u32 %s147, 1
        %s569 = smul.addr %s568, 4
        %s570 = scalar_lea.vmem [#allocation8], %s569
        %s571 = sand.u32 %s27, 1
        %s572 = scalar_lea.sflag [#allocation9], %s571
        %s573 = sand.u32 %s175, 1
        %s574 = smul.addr %s573, 4
        %s575 = scalar_lea.vmem [#allocation10], %s574
        // Predicated region
        $region41: #{tpu_custom_call.1} parent=31 // pred_check
          %p576 = pneg %p129
        $region42: #{tpu_custom_call.1} parent=31 // pred_check_branch
          %578 = sbr.rel (%p576) target = $region44
        $region43: #{tpu_custom_call.1} parent=31 // pred_region
          %s580 = ssub.s32 64, 64
          %581 = vsyncadd %s562, %s580
          %s582 = sadd.s32 %s32, %s31
          %s583 = smul.addr %s582, 64
          %s584 = scalar_lea.hbm %s3, %s583
          %s586 = sshll.u32 %s565, 4
          %s587 = int_to_ptr.vmem [resolvable:$true] %s586
          %589 = dma.vmem_to_hbm [thread:$0]  %s587, 64, %s584, %s562
        $region44: #{tpu_custom_call.1} parent=31 // pred_fallthru
          _
        // Predicated region
        $region45: #{tpu_custom_call.1} parent=31 // pred_check
          %p590 = pneg %p157
        $region46: #{tpu_custom_call.1} parent=31 // pred_check_branch
          %592 = sbr.rel (%p590) target = $region48
        $region47: #{tpu_custom_call.1} parent=31 // pred_region
          %s594 = ssub.s32 64, 64
          %595 = vsyncadd %s567, %s594
          %s596 = sadd.s32 %s32, %s31
          %s597 = smul.addr %s596, 64
          %s598 = scalar_lea.hbm %s4, %s597
          %s600 = sshll.u32 %s570, 4
          %s601 = int_to_ptr.vmem [resolvable:$true] %s600
          %603 = dma.vmem_to_hbm [thread:$0]  %s601, 64, %s598, %s567
        $region48: #{tpu_custom_call.1} parent=31 // pred_fallthru
          _
        // Predicated region
        $region49: #{tpu_custom_call.1} parent=31 // pred_check
          %p604 = pneg %p185
        $region50: #{tpu_custom_call.1} parent=31 // pred_check_branch
          %606 = sbr.rel (%p604) target = $region52
        $region51: #{tpu_custom_call.1} parent=31 // pred_region
          %s608 = ssub.s32 64, 64
          %609 = vsyncadd %s572, %s608
          %s610 = sadd.s32 %s32, %s31
          %s611 = smul.addr %s610, 64
          %s612 = scalar_lea.hbm %s5, %s611
          %s614 = sshll.u32 %s575, 4
          %s615 = int_to_ptr.vmem [resolvable:$true] %s614
          %617 = dma.vmem_to_hbm [thread:$0]  %s615, 64, %s612, %s572
        $region52: #{tpu_custom_call.1} parent=31 // pred_fallthru
          _
      $region32: #{tpu_custom_call.1} parent=5 // pred_fallthru
        _
      %p618 = scmp.le.s32.totalorder 2, %s22
      // Predicated region
      $region53: #{tpu_custom_call.1} parent=5 // pred_check
        %p619 = pneg %p618
      $region54: #{tpu_custom_call.1} parent=5 // pred_check_branch
        %621 = sbr.rel (%p619) target = $region56
      $region55: #{tpu_custom_call.1} parent=5 // pred_region
        %s622 = ssub.s32 %s22, 2
        // Predicated region
        $region57: #{tpu_custom_call.1} parent=55 // pred_check
          %p623 = pneg %p135
        $region58: #{tpu_custom_call.1} parent=55 // pred_check_branch
          %625 = sbr.rel (%p623) target = $region60
        $region59: #{tpu_custom_call.1} parent=55 // pred_region
          %s626 = sand.u32 %s120, 1
          %s627 = scalar_lea.sflag [#allocation4], %s626
          %s628 = sand.u32 %s120, 1
          %s629 = smul.addr %s628, 4
          %s630 = scalar_lea.vmem [#allocation7], %s629
          %631 = dma.done %s627, 64
        $region60: #{tpu_custom_call.1} parent=55 // pred_fallthru
          _
        // Predicated region
        $region61: #{tpu_custom_call.1} parent=55 // pred_check
          %p632 = pneg %p163
        $region62: #{tpu_custom_call.1} parent=55 // pred_check_branch
          %634 = sbr.rel (%p632) target = $region64
        $region63: #{tpu_custom_call.1} parent=55 // pred_region
          %s635 = sand.u32 %s28, 1
          %s636 = scalar_lea.sflag [#allocation9], %s635
          %s637 = sand.u32 %s148, 1
          %s638 = smul.addr %s637, 4
          %s639 = scalar_lea.vmem [#allocation8], %s638
          %640 = dma.done %s636, 64
        $region64: #{tpu_custom_call.1} parent=55 // pred_fallthru
          _
        // Predicated region
        $region65: #{tpu_custom_call.1} parent=55 // pred_check
          %p641 = pneg %p191
        $region66: #{tpu_custom_call.1} parent=55 // pred_check_branch
          %643 = sbr.rel (%p641) target = $region68
        $region67: #{tpu_custom_call.1} parent=55 // pred_region
          %s644 = sand.u32 %s28, 1
          %s645 = scalar_lea.sflag [#allocation9], %s644
          %s646 = sand.u32 %s176, 1
          %s647 = smul.addr %s646, 4
          %s648 = scalar_lea.vmem [#allocation10], %s647
          %649 = dma.done %s645, 64
        $region68: #{tpu_custom_call.1} parent=55 // pred_fallthru
          _
      $region56: #{tpu_custom_call.1} parent=5 // pred_fallthru
        _
    $region6: #{tpu_custom_call.1} parent=1 // loop_footer
      %s26 = sadd.s32 1, %s22
    $region7: #{tpu_custom_call.1} parent=1 // loop_footer_branch
      %21 = sbr.rel target = $region3
    $region8: #{tpu_custom_call.1} parent=1 // loop_exit
      _
    %650 = vsyncpa [#allocation3], 1
    %s651 = scalar_lea.sflag [#allocation3], 1
    %652 = vsyncpa %s651, 1
    %653 = vsyncpa [#allocation6], 1
    %654 = vsyncpa [#allocation4], 1
    %s655 = scalar_lea.sflag [#allocation4], 1
    %656 = vsyncpa %s655, 1
    %657 = vsyncpa [#allocation9], 1
    %s658 = scalar_lea.sflag [#allocation9], 1
    %659 = vsyncpa %s658, 1

</llo_original>
